<compile_context>
chip_gen: v5e
topology: v5e:2x2
jax: 0.10.0
libtpu: 0.0.40
codegen_flags: <defaults>
</compile_context>

<pallas_src>
import jax
import jax.numpy as jnp
from jax import lax
from jax.experimental import pallas as pl
from jax.experimental.pallas import tpu as pltpu


def _round_up(x, m):
    return ((x + m - 1) // m) * m


def _wordemb_avg_kernel(text_ref, emb_ref, w1_ref, b1_ref, w2_ref, b2_ref, out_ref):
    # text_ref: [Bp, S] int32 (batch-major), emb_ref: [Vp, Ep] bf16,
    # w1_ref: [Ep, Hp] bf16, b1_ref: [1, Hp] f32, w2_ref: [Hp, Op] bf16,
    # b2_ref: [1, Op] f32, out_ref: [Bp, Op] f32.
    Bp, S = text_ref.shape
    Vp = emb_ref.shape[0]

    tokens = text_ref[...]                                        # [Bp, S] int32
    # Hoisted lane-iota (cheapest iota form); compares run on the VPU in int32.
    iota_bv = lax.broadcasted_iota(jnp.int32, (Bp, Vp), 1)        # [Bp, Vp]

    # Bag-of-words counts accumulated over S; live data stays O(B*V).
    # S is a small static constant -> fully unrolled (== fori_loop(unroll=True)).
    counts = jnp.zeros((Bp, Vp), jnp.float32)
    for s in range(S):
        counts = counts + (tokens[:, s:s + 1] == iota_bv).astype(jnp.float32)

    # mean-over-seq as an MXU matmul (bf16 operands, f32 accumulation);
    # fold 1/S into a post-matmul scale inside the kernel.
    avg = jnp.dot(counts.astype(jnp.bfloat16), emb_ref[...],
                  preferred_element_type=jnp.float32) * (1.0 / S)  # [Bp, Ep] f32

    # linear1 + ReLU (bias add / ReLU stay f32 on the VPU)
    h = jnp.dot(avg.astype(jnp.bfloat16), w1_ref[...],
                preferred_element_type=jnp.float32) + b1_ref[...]  # [Bp, Hp] f32
    h = jnp.maximum(h, 0.0)

    # linear2
    out = jnp.dot(h.astype(jnp.bfloat16), w2_ref[...],
                  preferred_element_type=jnp.float32) + b2_ref[...]  # [Bp, Op] f32
    out_ref[...] = out.astype(out_ref.dtype)


def wordemb_avg_2linear(text, embedding, w1, b1, w2, b2, pad_id=0):
    """text: int32 [S, B]; embedding: [V, E]; w1: [E, H]; b1: [H]; w2: [H, O]; b2: [O]."""
    S, B = text.shape
    V, E = embedding.shape
    H = w1.shape[1]
    O = w2.shape[1]

    # Lane/sublane-dense padded dims (layout plumbing; sliced back below).
    Bp = max(_round_up(B, 8), 8)
    Vp = _round_up(V, 128)
    Ep = _round_up(E, 128)
    Hp = _round_up(H, 128)
    Op = _round_up(O, 128)

    # Batch-major token ids; extra batch rows filled with a valid id and sliced off.
    text_t = jnp.pad(text.T.astype(jnp.int32), ((0, Bp - B), (0, 0)),
                     constant_values=pad_id)
    # Zero-pad then cast MXU operands to bf16 (zero rows/cols contribute exactly 0).
    emb_p = jnp.pad(embedding, ((0, Vp - V), (0, Ep - E))).astype(jnp.bfloat16)
    w1_p = jnp.pad(w1, ((0, Ep - E), (0, Hp - H))).astype(jnp.bfloat16)
    w2_p = jnp.pad(w2, ((0, Hp - H), (0, Op - O))).astype(jnp.bfloat16)
    b1_p = jnp.pad(b1, (0, Hp - H)).reshape(1, Hp)   # f32
    b2_p = jnp.pad(b2, (0, Op - O)).reshape(1, Op)   # f32

    flops = 2 * Bp * (Vp * Ep + Ep * Hp + Hp * Op) + S * Bp * Vp
    bytes_accessed = (text_t.size * 4 + emb_p.size * 2 + w1_p.size * 2
                      + w2_p.size * 2 + b1_p.size * 4 + b2_p.size * 4
                      + Bp * Op * 4)

    vmem_spec = pl.BlockSpec(memory_space=pltpu.MemorySpace.VMEM)
    out_p = pl.pallas_call(
        _wordemb_avg_kernel,
        out_shape=jax.ShapeDtypeStruct((Bp, Op), jnp.float32),
        in_specs=[vmem_spec] * 6,
        out_specs=vmem_spec,
        cost_estimate=pl.CostEstimate(flops=int(flops), transcendentals=0,
                                      bytes_accessed=int(bytes_accessed)),
    )(text_t, emb_p, w1_p, b1_p, w2_p, b2_p)

    return out_p[:B, :O]


def reference_f32(text, embedding, w1, b1, w2, b2):
    """Pure-f32 reference matching the PyTorch module's math."""
    emb = jnp.take(embedding, text, axis=0)
    avg = jnp.mean(emb, axis=0)
    h = jnp.maximum(avg @ w1 + b1, 0.0)
    return h @ w2 + b2


def reference_matched_precision(text, embedding, w1, b1, w2, b2):
    """Same math with the kernel's bf16-operand / f32-accumulation precision."""
    bf = jnp.bfloat16
    S, _ = text.shape
    onehot = jax.nn.one_hot(text, embedding.shape[0], dtype=jnp.float32)   # [S, B, V]
    counts = onehot.sum(axis=0)                                            # [B, V]
    avg = jnp.dot(counts.astype(bf), embedding.astype(bf),
                  preferred_element_type=jnp.float32) * (1.0 / S)
    h = jnp.maximum(jnp.dot(avg.astype(bf), w1.astype(bf),
                            preferred_element_type=jnp.float32) + b1, 0.0)
    return jnp.dot(h.astype(bf), w2.astype(bf),
                   preferred_element_type=jnp.float32) + b2


if __name__ == "__main__":
    # Module hyperparameters (synthetic, deterministic init).
    input_dim = 64       # vocab size
    embedding_dim = 32
    hidden_dim = 32
    output_dim = 8
    pad_idx = 0
    seq_len = 8
    batch = 4

    key = jax.random.PRNGKey(0)
    k_emb, k_w1, k_b1, k_w2, k_b2, k_txt = jax.random.split(key, 6)

    # nn.Embedding: N(0,1) init, padding_idx row zeroed.
    embedding = jax.random.normal(k_emb, (input_dim, embedding_dim), dtype=jnp.float32)
    embedding = embedding.at[pad_idx].set(0.0)

    # nn.Linear weights stored as [in, out] (transposed vs torch's [out, in]).
    lim1 = 1.0 / (embedding_dim ** 0.5)
    w1 = jax.random.uniform(k_w1, (embedding_dim, hidden_dim), jnp.float32, -lim1, lim1)
    b1 = jax.random.uniform(k_b1, (hidden_dim,), jnp.float32, -lim1, lim1)
    lim2 = 1.0 / (hidden_dim ** 0.5)
    w2 = jax.random.uniform(k_w2, (hidden_dim, output_dim), jnp.float32, -lim2, lim2)
    b2 = jax.random.uniform(k_b2, (output_dim,), jnp.float32, -lim2, lim2)

    # text: [seq_len, batch] integer token ids (includes some pad tokens).
    text = jax.random.randint(k_txt, (seq_len, batch), 0, input_dim, dtype=jnp.int32)

    out = wordemb_avg_2linear(text, embedding, w1, b1, w2, b2, pad_id=pad_idx)
    out = jax.block_until_ready(out)
    assert out.shape == (batch, output_dim)

    # Tight check vs a precision-matched reference (bf16 MXU operands, f32 accum).
    ref_bf = reference_matched_precision(text, embedding, w1, b1, w2, b2)
    assert jnp.allclose(out, ref_bf, atol=1e-3, rtol=1e-3)

    # Loose check vs the pure-f32 PyTorch-equivalent reference (tolerance
    # widened because MXU operands are bf16, per perf review).
    ref32 = reference_f32(text, embedding, w1, b1, w2, b2)
    assert jnp.allclose(out, ref32, atol=5e-2, rtol=5e-2)

    print("KERNEL_OK")
</pallas_src>

<mosaic_0001>
module attributes {stable_mosaic.version = 11 : i64} {
  func.func @_wordemb_avg_kernel(%arg0: memref<8x8xi32, #tpu.memory_space<vmem>>, %arg1: memref<128x128xbf16, #tpu.memory_space<vmem>>, %arg2: memref<128x128xbf16, #tpu.memory_space<vmem>>, %arg3: memref<1x128xf32, #tpu.memory_space<vmem>>, %arg4: memref<128x128xbf16, #tpu.memory_space<vmem>>, %arg5: memref<1x128xf32, #tpu.memory_space<vmem>>, %arg6: memref<8x128xf32, #tpu.memory_space<vmem>>) attributes {dimension_semantics = [], scalar_prefetch = 0 : i64, scratch_operands = 0 : i64, tpu.core_type = #tpu.core_type<tc>} {
    %c0 = arith.constant 0 : index
    %c0_0 = arith.constant 0 : index
    %0 = vector.load %arg0[%c0, %c0_0] : memref<8x8xi32, #tpu.memory_space<vmem>>, vector<8x8xi32>
    %1 = tpu.iota {dimensions = array<i32: 1>} : vector<8x128xi32>
    %cst = arith.constant 0.000000e+00 : f32
    %2 = vector.broadcast %cst : f32 to vector<8x128xf32>
    %3 = vector.extract_strided_slice %0 {offsets = [0, 0], sizes = [8, 1], strides = [1, 1]} : vector<8x8xi32> to vector<8x1xi32>
    %4 = vector.broadcast %3 : vector<8x1xi32> to vector<8x128xi32>
    %5 = arith.cmpi eq, %4, %1 : vector<8x128xi32>
    %6 = arith.extui %5 : vector<8x128xi1> to vector<8x128xi32>
    %7 = arith.sitofp %6 : vector<8x128xi32> to vector<8x128xf32>
    %8 = arith.addf %2, %7 : vector<8x128xf32>
    %9 = vector.extract_strided_slice %0 {offsets = [0, 1], sizes = [8, 1], strides = [1, 1]} : vector<8x8xi32> to vector<8x1xi32>
    %10 = vector.broadcast %9 : vector<8x1xi32> to vector<8x128xi32>
    %11 = arith.cmpi eq, %10, %1 : vector<8x128xi32>
    %12 = arith.extui %11 : vector<8x128xi1> to vector<8x128xi32>
    %13 = arith.sitofp %12 : vector<8x128xi32> to vector<8x128xf32>
    %14 = arith.addf %8, %13 : vector<8x128xf32>
    %15 = vector.extract_strided_slice %0 {offsets = [0, 2], sizes = [8, 1], strides = [1, 1]} : vector<8x8xi32> to vector<8x1xi32>
    %16 = vector.broadcast %15 : vector<8x1xi32> to vector<8x128xi32>
    %17 = arith.cmpi eq, %16, %1 : vector<8x128xi32>
    %18 = arith.extui %17 : vector<8x128xi1> to vector<8x128xi32>
    %19 = arith.sitofp %18 : vector<8x128xi32> to vector<8x128xf32>
    %20 = arith.addf %14, %19 : vector<8x128xf32>
    %21 = vector.extract_strided_slice %0 {offsets = [0, 3], sizes = [8, 1], strides = [1, 1]} : vector<8x8xi32> to vector<8x1xi32>
    %22 = vector.broadcast %21 : vector<8x1xi32> to vector<8x128xi32>
    %23 = arith.cmpi eq, %22, %1 : vector<8x128xi32>
    %24 = arith.extui %23 : vector<8x128xi1> to vector<8x128xi32>
    %25 = arith.sitofp %24 : vector<8x128xi32> to vector<8x128xf32>
    %26 = arith.addf %20, %25 : vector<8x128xf32>
    %27 = vector.extract_strided_slice %0 {offsets = [0, 4], sizes = [8, 1], strides = [1, 1]} : vector<8x8xi32> to vector<8x1xi32>
    %28 = vector.broadcast %27 : vector<8x1xi32> to vector<8x128xi32>
    %29 = arith.cmpi eq, %28, %1 : vector<8x128xi32>
    %30 = arith.extui %29 : vector<8x128xi1> to vector<8x128xi32>
    %31 = arith.sitofp %30 : vector<8x128xi32> to vector<8x128xf32>
    %32 = arith.addf %26, %31 : vector<8x128xf32>
    %33 = vector.extract_strided_slice %0 {offsets = [0, 5], sizes = [8, 1], strides = [1, 1]} : vector<8x8xi32> to vector<8x1xi32>
    %34 = vector.broadcast %33 : vector<8x1xi32> to vector<8x128xi32>
    %35 = arith.cmpi eq, %34, %1 : vector<8x128xi32>
    %36 = arith.extui %35 : vector<8x128xi1> to vector<8x128xi32>
    %37 = arith.sitofp %36 : vector<8x128xi32> to vector<8x128xf32>
    %38 = arith.addf %32, %37 : vector<8x128xf32>
    %39 = vector.extract_strided_slice %0 {offsets = [0, 6], sizes = [8, 1], strides = [1, 1]} : vector<8x8xi32> to vector<8x1xi32>
    %40 = vector.broadcast %39 : vector<8x1xi32> to vector<8x128xi32>
    %41 = arith.cmpi eq, %40, %1 : vector<8x128xi32>
    %42 = arith.extui %41 : vector<8x128xi1> to vector<8x128xi32>
    %43 = arith.sitofp %42 : vector<8x128xi32> to vector<8x128xf32>
    %44 = arith.addf %38, %43 : vector<8x128xf32>
    %45 = vector.extract_strided_slice %0 {offsets = [0, 7], sizes = [8, 1], strides = [1, 1]} : vector<8x8xi32> to vector<8x1xi32>
    %46 = vector.broadcast %45 : vector<8x1xi32> to vector<8x128xi32>
    %47 = arith.cmpi eq, %46, %1 : vector<8x128xi32>
    %48 = arith.extui %47 : vector<8x128xi1> to vector<8x128xi32>
    %49 = arith.sitofp %48 : vector<8x128xi32> to vector<8x128xf32>
    %50 = arith.addf %44, %49 : vector<8x128xf32>
    %51 = arith.truncf %50 : vector<8x128xf32> to vector<8x128xbf16>
    %c0_1 = arith.constant 0 : index
    %c0_2 = arith.constant 0 : index
    %52 = vector.load %arg1[%c0_1, %c0_2] : memref<128x128xbf16, #tpu.memory_space<vmem>>, vector<128x128xbf16>
    %cst_3 = arith.constant dense<0.000000e+00> : vector<8x128xf32>
    %53 = tpu.matmul %51, %52, %cst_3 {dimension_numbers = #tpu.dot_dimension_numbers<[1], [0], [0], [1], [0, 0, 1, 1], [], []>} : vector<8x128xbf16>, vector<128x128xbf16>, vector<8x128xf32> -> vector<8x128xf32>
    %cst_4 = arith.constant 1.250000e-01 : f32
    %54 = vector.broadcast %cst_4 : f32 to vector<8x128xf32>
    %55 = arith.mulf %53, %54 : vector<8x128xf32>
    %56 = arith.truncf %55 : vector<8x128xf32> to vector<8x128xbf16>
    %c0_5 = arith.constant 0 : index
    %c0_6 = arith.constant 0 : index
    %57 = vector.load %arg2[%c0_5, %c0_6] : memref<128x128xbf16, #tpu.memory_space<vmem>>, vector<128x128xbf16>
    %cst_7 = arith.constant dense<0.000000e+00> : vector<8x128xf32>
    %58 = tpu.matmul %56, %57, %cst_7 {dimension_numbers = #tpu.dot_dimension_numbers<[1], [0], [0], [1], [0, 0, 1, 1], [], []>} : vector<8x128xbf16>, vector<128x128xbf16>, vector<8x128xf32> -> vector<8x128xf32>
    %c0_8 = arith.constant 0 : index
    %c0_9 = arith.constant 0 : index
    %59 = vector.load %arg3[%c0_8, %c0_9] : memref<1x128xf32, #tpu.memory_space<vmem>>, vector<1x128xf32>
    %60 = vector.broadcast %59 : vector<1x128xf32> to vector<8x128xf32>
    %61 = arith.addf %58, %60 : vector<8x128xf32>
    %cst_10 = arith.constant 0.000000e+00 : f32
    %62 = vector.broadcast %cst_10 : f32 to vector<8x128xf32>
    %63 = arith.maximumf %61, %62 : vector<8x128xf32>
    %64 = arith.truncf %63 : vector<8x128xf32> to vector<8x128xbf16>
    %c0_11 = arith.constant 0 : index
    %c0_12 = arith.constant 0 : index
    %65 = vector.load %arg4[%c0_11, %c0_12] : memref<128x128xbf16, #tpu.memory_space<vmem>>, vector<128x128xbf16>
    %cst_13 = arith.constant dense<0.000000e+00> : vector<8x128xf32>
    %66 = tpu.matmul %64, %65, %cst_13 {dimension_numbers = #tpu.dot_dimension_numbers<[1], [0], [0], [1], [0, 0, 1, 1], [], []>} : vector<8x128xbf16>, vector<128x128xbf16>, vector<8x128xf32> -> vector<8x128xf32>
    %c0_14 = arith.constant 0 : index
    %c0_15 = arith.constant 0 : index
    %67 = vector.load %arg5[%c0_14, %c0_15] : memref<1x128xf32, #tpu.memory_space<vmem>>, vector<1x128xf32>
    %68 = vector.broadcast %67 : vector<1x128xf32> to vector<8x128xf32>
    %69 = arith.addf %66, %68 : vector<8x128xf32>
    %c0_16 = arith.constant 0 : index
    %c0_17 = arith.constant 0 : index
    %70 = vector.load %arg6[%c0_16, %c0_17] : memref<8x128xf32, #tpu.memory_space<vmem>>, vector<8x128xf32>
    tpu.vector_store %arg6[%c0_16, %c0_17], %69 {strides = array<i32>} : memref<8x128xf32, #tpu.memory_space<vmem>>, vector<8x128xf32>,
    return
  }
}

</mosaic_0001>

<llo_original>
// kernel: tpu_custom_call.1
$region0: #{tpu_custom_call.1}
  #allocation0 [shape = 'u32[]', space=smem, size = 0x4, offset = 0x4, fixed_abs, tag = 'smem constant byte address 0x4 - core index']
  #allocation1 [shape = 'u32[72,128]{1,0:T(1,128)}', space=vmem, size = 0x9000, scoped, tag = 'internal scratch']
  %s0 = inlined_call_operand.hbm [shape: s32[8,8], index: 0, kind: input, shape index: {}]
  %s1 = inlined_call_operand.hbm [shape: bf16[128,128], index: 1, kind: input, shape index: {}]
  %s2 = inlined_call_operand.hbm [shape: bf16[128,128], index: 2, kind: input, shape index: {}]
  %s3 = inlined_call_operand.vmem [shape: f32[1,128], index: 3, kind: input, shape index: {}]
  %s4 = inlined_call_operand.hbm [shape: bf16[128,128], index: 4, kind: input, shape index: {}]
  %s5 = inlined_call_operand.vmem [shape: f32[1,128], index: 5, kind: input, shape index: {}]
  %s6 = inlined_call_operand.hbm [shape: f32[8,128], index: 6, kind: output, shape index: {}]
  %s7 = sld [smem:[#allocation0]]
  $region50: #{tpu_custom_call.1} parent=0
    _
  %s9 = ssub.s32 1, %s7
  %s10 = scalar_select 0, %s9, %s7
  $region1: #{tpu_custom_call.1} parent=0
    #allocation2 [shape = 'u8[4096]{0}', space=vmem, size = 0x1000, scoped, tag = 'input window, operand 0, single buffered']
    #allocation3 [shape = 's32[1]{0}', space=sflag, size = 0x4, scoped, tag = 'scoped memory for tpu_custom_call.1']
    #allocation4 [shape = 's32[1]{0}', space=sflag, size = 0x4, scoped, tag = 'scoped memory for tpu_custom_call.1']
    #allocation5 [shape = 'u8[32768]{0}', space=vmem, size = 0x8000, scoped, tag = 'input window, operand 1, single buffered']
    #allocation6 [shape = 's32[1]{0}', space=sflag, size = 0x4, scoped, tag = 'scoped memory for tpu_custom_call.1']
    #allocation7 [shape = 'u8[32768]{0}', space=vmem, size = 0x8000, scoped, tag = 'input window, operand 2, single buffered']
    #allocation8 [shape = 'u8[32768]{0}', space=vmem, size = 0x8000, scoped, tag = 'input window, operand 4, single buffered']
    #allocation9 [shape = 's32[1]{0}', space=sflag, size = 0x4, scoped, tag = 'scoped memory for tpu_custom_call.1']
    #allocation10 [shape = 'u8[4096]{0}', space=vmem, size = 0x1000, scoped, tag = 'output window, operand 0, single buffered']
    %11 = vsyncpa [#allocation3], 0
    %12 = vsyncpa [#allocation6], 0
    %13 = vsyncpa [#allocation9], 0
    %14 = vsyncpa [#allocation4], 0
    // Predicated region
    $region2: #{tpu_custom_call.1} parent=1 // pred_check
      _
    $region3: #{tpu_custom_call.1} parent=1 // pred_check_branch
      %16 = sbr.rel (0) target = $region5
    $region4: #{tpu_custom_call.1} parent=1 // pred_region
      %18 = vsyncadd [#allocation3], 0
      %s20 = sshll.u32 %s0, 4
      %s21 = int_to_ptr.hbm [resolvable:$true] %s20
      %s22 = sshll.u32 [#allocation2], 4
      %s23 = int_to_ptr.vmem [resolvable:$true] %s22
      %25 = dma.hbm_to_vmem [thread:$0]  %s21, 128, %s23, [#allocation3]
    $region5: #{tpu_custom_call.1} parent=1 // pred_fallthru
      _
    // Predicated region
    $region6: #{tpu_custom_call.1} parent=1 // pred_check
      _
    $region7: #{tpu_custom_call.1} parent=1 // pred_check_branch
      %27 = sbr.rel (0) target = $region9
    $region8: #{tpu_custom_call.1} parent=1 // pred_region
      %29 = vsyncadd [#allocation6], 0
      %s30 = sshll.u32 %s1, 4
      %s31 = int_to_ptr.hbm [resolvable:$true] %s30
      %s32 = sshll.u32 [#allocation5], 4
      %s33 = int_to_ptr.vmem [resolvable:$true] %s32
      %38 = dma.hbm_to_vmem [thread:$0]  %s31, 1024, %s33, [#allocation6], 64, 64, 4
    $region9: #{tpu_custom_call.1} parent=1 // pred_fallthru
      _
    // Predicated region
    $region10: #{tpu_custom_call.1} parent=1 // pred_check
      _
    $region11: #{tpu_custom_call.1} parent=1 // pred_check_branch
      %40 = sbr.rel (0) target = $region13
    $region12: #{tpu_custom_call.1} parent=1 // pred_region
      %42 = vsyncadd [#allocation6], 0
      %s43 = sshll.u32 %s2, 4
      %s44 = int_to_ptr.hbm [resolvable:$true] %s43
      %s45 = sshll.u32 [#allocation7], 4
      %s46 = int_to_ptr.vmem [resolvable:$true] %s45
      %51 = dma.hbm_to_vmem [thread:$0]  %s44, 1024, %s46, [#allocation6], 64, 64, 4
    $region13: #{tpu_custom_call.1} parent=1 // pred_fallthru
      _
    // Predicated region
    $region14: #{tpu_custom_call.1} parent=1 // pred_check
      _
    $region15: #{tpu_custom_call.1} parent=1 // pred_check_branch
      %53 = sbr.rel (0) target = $region17
    $region16: #{tpu_custom_call.1} parent=1 // pred_region
      _
    $region17: #{tpu_custom_call.1} parent=1 // pred_fallthru
      _
    // Predicated region
    $region18: #{tpu_custom_call.1} parent=1 // pred_check
      _
    $region19: #{tpu_custom_call.1} parent=1 // pred_check_branch
      %55 = sbr.rel (0) target = $region21
    $region20: #{tpu_custom_call.1} parent=1 // pred_region
      %57 = vsyncadd [#allocation9], 0
      %s58 = sshll.u32 %s4, 4
      %s59 = int_to_ptr.hbm [resolvable:$true] %s58
      %s60 = sshll.u32 [#allocation8], 4
      %s61 = int_to_ptr.vmem [resolvable:$true] %s60
      %66 = dma.hbm_to_vmem [thread:$0]  %s59, 1024, %s61, [#allocation9], 64, 64, 4
    $region21: #{tpu_custom_call.1} parent=1 // pred_fallthru
      _
    // Predicated region
    $region22: #{tpu_custom_call.1} parent=1 // pred_check
      _
    $region23: #{tpu_custom_call.1} parent=1 // pred_check_branch
      %68 = sbr.rel (0) target = $region25
    $region24: #{tpu_custom_call.1} parent=1 // pred_region
      _
    $region25: #{tpu_custom_call.1} parent=1 // pred_fallthru
      _
    // Predicated region
    $region26: #{tpu_custom_call.1} parent=1 // pred_check
      _
    $region27: #{tpu_custom_call.1} parent=1 // pred_check_branch
      %70 = sbr.rel (0) target = $region29
    $region28: #{tpu_custom_call.1} parent=1 // pred_region
      %72 = dma.done [#allocation3], 128
    $region29: #{tpu_custom_call.1} parent=1 // pred_fallthru
      _
    // Predicated region
    $region30: #{tpu_custom_call.1} parent=1 // pred_check
      _
    $region31: #{tpu_custom_call.1} parent=1 // pred_check_branch
      %74 = sbr.rel (0) target = $region33
    $region32: #{tpu_custom_call.1} parent=1 // pred_region
      %76 = dma.done [#allocation6], 1024
    $region33: #{tpu_custom_call.1} parent=1 // pred_fallthru
      _
    // Predicated region
    $region34: #{tpu_custom_call.1} parent=1 // pred_check
      _
    $region35: #{tpu_custom_call.1} parent=1 // pred_check_branch
      %78 = sbr.rel (0) target = $region37
    $region36: #{tpu_custom_call.1} parent=1 // pred_region
      %80 = dma.done [#allocation6], 1024
    $region37: #{tpu_custom_call.1} parent=1 // pred_fallthru
      _
    // Predicated region
    $region38: #{tpu_custom_call.1} parent=1 // pred_check
      _
    $region39: #{tpu_custom_call.1} parent=1 // pred_check_branch
      %82 = sbr.rel (0) target = $region41
    $region40: #{tpu_custom_call.1} parent=1 // pred_region
      %84 = dma.done [#allocation9], 1024
    $region41: #{tpu_custom_call.1} parent=1 // pred_fallthru
      _
    %v85 = vld [vmem:[#allocation2] sm:$0xff]
    %v86 = vlaneseq
    %v87 = vand.u32 %v86, 127
    %88 = vset.pattern.permute.xlu0 0
    %89 = vperm.xlu0 %88, %v85
    %v90 = vpop.permute.xlu0 %89
    %vm91 = vcmp.eq.s32.totalorder %v90, %v87
    %v92 = vsel %vm91, 1, 0
    %v93 = vcvt.s32.f32 %v92
    %v94 = vadd.f32 %v93, 0.0
    %95 = vset.pattern.permute.xlu0 1
    %96 = vperm.xlu0 %95, %v85
    %v97 = vpop.permute.xlu0 %96
    %vm98 = vcmp.eq.s32.totalorder %v97, %v87
    %v99 = vsel %vm98, 1, 0
    %v100 = vcvt.s32.f32 %v99
    %v101 = vadd.f32 %v94, %v100
    %102 = vset.pattern.permute.xlu0 2
    %103 = vperm.xlu0 %102, %v85
    %v104 = vpop.permute.xlu0 %103
    %vm105 = vcmp.eq.s32.totalorder %v104, %v87
    %v106 = vsel %vm105, 1, 0
    %v107 = vcvt.s32.f32 %v106
    %v108 = vadd.f32 %v101, %v107
    %109 = vset.pattern.permute.xlu0 3
    %110 = vperm.xlu0 %109, %v85
    %v111 = vpop.permute.xlu0 %110
    %vm112 = vcmp.eq.s32.totalorder %v111, %v87
    %v113 = vsel %vm112, 1, 0
    %v114 = vcvt.s32.f32 %v113
    %v115 = vadd.f32 %v108, %v114
    %116 = vset.pattern.permute.xlu0 4
    %117 = vperm.xlu0 %116, %v85
    %v118 = vpop.permute.xlu0 %117
    %vm119 = vcmp.eq.s32.totalorder %v118, %v87
    %v120 = vsel %vm119, 1, 0
    %v121 = vcvt.s32.f32 %v120
    %v122 = vadd.f32 %v115, %v121
    %123 = vset.pattern.permute.xlu0 5
    %124 = vperm.xlu0 %123, %v85
    %v125 = vpop.permute.xlu0 %124
    %vm126 = vcmp.eq.s32.totalorder %v125, %v87
    %v127 = vsel %vm126, 1, 0
    %v128 = vcvt.s32.f32 %v127
    %v129 = vadd.f32 %v122, %v128
    %130 = vset.pattern.permute.xlu0 6
    %131 = vperm.xlu0 %130, %v85
    %v132 = vpop.permute.xlu0 %131
    %vm133 = vcmp.eq.s32.totalorder %v132, %v87
    %v134 = vsel %vm133, 1, 0
    %v135 = vcvt.s32.f32 %v134
    %v136 = vadd.f32 %v129, %v135
    %137 = vset.pattern.permute.xlu0 7
    %138 = vperm.xlu0 %137, %v85
    %v139 = vpop.permute.xlu0 %138
    %vm140 = vcmp.eq.s32.totalorder %v139, %v87
    %v141 = vsel %vm140, 1, 0
    %v142 = vcvt.s32.f32 %v141
    %v143 = vadd.f32 %v136, %v142
    %v144 = vpack.c.bf16 %v143, %v143
    %v145 = vld [vmem:[#allocation5] sm:$0xf]
    %v146 = vld [vmem:[#allocation5 + $0x4] sm:$0xf]
    %v147 = vld [vmem:[#allocation5 + $0x8] sm:$0xf]
    %v148 = vld [vmem:[#allocation5 + $0xc] sm:$0xf]
    %v149 = vld [vmem:[#allocation5 + $0x10] sm:$0xf]
    %v150 = vld [vmem:[#allocation5 + $0x14] sm:$0xf]
    %v151 = vld [vmem:[#allocation5 + $0x18] sm:$0xf]
    %v152 = vld [vmem:[#allocation5 + $0x1c] sm:$0xf]
    %v153 = vld [vmem:[#allocation5 + $0x20] sm:$0xf]
    %v154 = vld [vmem:[#allocation5 + $0x24] sm:$0xf]
    %v155 = vld [vmem:[#allocation5 + $0x28] sm:$0xf]
    %v156 = vld [vmem:[#allocation5 + $0x2c] sm:$0xf]
    %v157 = vld [vmem:[#allocation5 + $0x30] sm:$0xf]
    %v158 = vld [vmem:[#allocation5 + $0x34] sm:$0xf]
    %v159 = vld [vmem:[#allocation5 + $0x38] sm:$0xf]
    %v160 = vld [vmem:[#allocation5 + $0x3c] sm:$0xf]
    %v177 = vunpack.c.l.b16 %v145
    %v178 = vunpack.c.l.b16 %v146
    %v179 = vunpack.c.l.b16 %v147
    %v180 = vunpack.c.l.b16 %v148
    %v181 = vunpack.c.l.b16 %v149
    %v182 = vunpack.c.l.b16 %v150
    %v183 = vunpack.c.l.b16 %v151
    %v184 = vunpack.c.l.b16 %v152
    %v185 = vunpack.c.l.b16 %v153
    %v186 = vunpack.c.l.b16 %v154
    %v187 = vunpack.c.l.b16 %v155
    %v188 = vunpack.c.l.b16 %v156
    %v189 = vunpack.c.l.b16 %v157
    %v190 = vunpack.c.l.b16 %v158
    %v191 = vunpack.c.l.b16 %v159
    %v192 = vunpack.c.l.b16 %v160
    %v193 = vpack.c.b16 %v178, %v177
    %v194 = vpack.c.b16 %v180, %v179
    %v195 = vpack.c.b16 %v182, %v181
    %v196 = vpack.c.b16 %v184, %v183
    %v197 = vpack.c.b16 %v186, %v185
    %v198 = vpack.c.b16 %v188, %v187
    %v199 = vpack.c.b16 %v190, %v189
    %v200 = vpack.c.b16 %v192, %v191
    %209 = vmatpush.bf16.msra.mxu0 %v200
    %210 = vmatpush.bf16.msra.mxu0 %v199
    %211 = vmatpush.bf16.msra.mxu0 %v198
    %212 = vmatpush.bf16.msra.mxu0 %v197
    %213 = vmatpush.bf16.msra.mxu0 %v196
    %214 = vmatpush.bf16.msra.mxu0 %v195
    %215 = vmatpush.bf16.msra.mxu0 %v194
    %216 = vmatpush.bf16.msra.mxu0 %v193
    %217 = vmatmul.bf16.gmra.mxu0 %v144
    %v218 = vpop.f32.mrf.mxu0
    %v219 = vadd.f32 0.0, %v218
    %v220 = vpop.f32.mrf.mxu0
    %221 = vdwg.mxu0
    %v222 = vmul.f32 %v219, 0.125
    %v223 = vpack.c.bf16 %v222, %v222
    %v224 = vld [vmem:[#allocation7] sm:$0xf]
    %v225 = vld [vmem:[#allocation7 + $0x4] sm:$0xf]
    %v226 = vld [vmem:[#allocation7 + $0x8] sm:$0xf]
    %v227 = vld [vmem:[#allocation7 + $0xc] sm:$0xf]
    %v228 = vld [vmem:[#allocation7 + $0x10] sm:$0xf]
    %v229 = vld [vmem:[#allocation7 + $0x14] sm:$0xf]
    %v230 = vld [vmem:[#allocation7 + $0x18] sm:$0xf]
    %v231 = vld [vmem:[#allocation7 + $0x1c] sm:$0xf]
    %v232 = vld [vmem:[#allocation7 + $0x20] sm:$0xf]
    %v233 = vld [vmem:[#allocation7 + $0x24] sm:$0xf]
    %v234 = vld [vmem:[#allocation7 + $0x28] sm:$0xf]
    %v235 = vld [vmem:[#allocation7 + $0x2c] sm:$0xf]
    %v236 = vld [vmem:[#allocation7 + $0x30] sm:$0xf]
    %v237 = vld [vmem:[#allocation7 + $0x34] sm:$0xf]
    %v238 = vld [vmem:[#allocation7 + $0x38] sm:$0xf]
    %v239 = vld [vmem:[#allocation7 + $0x3c] sm:$0xf]
    %v240 = vld [vmem:[%s3] sm:$0x1]
    %v242 = vperm.slane %v240, 0
    %v260 = vunpack.c.l.b16 %v224
    %v261 = vunpack.c.l.b16 %v225
    %v262 = vunpack.c.l.b16 %v226
    %v263 = vunpack.c.l.b16 %v227
    %v264 = vunpack.c.l.b16 %v228
    %v265 = vunpack.c.l.b16 %v229
    %v266 = vunpack.c.l.b16 %v230
    %v267 = vunpack.c.l.b16 %v231
    %v268 = vunpack.c.l.b16 %v232
    %v269 = vunpack.c.l.b16 %v233
    %v270 = vunpack.c.l.b16 %v234
    %v271 = vunpack.c.l.b16 %v235
    %v272 = vunpack.c.l.b16 %v236
    %v273 = vunpack.c.l.b16 %v237
    %v274 = vunpack.c.l.b16 %v238
    %v275 = vunpack.c.l.b16 %v239
    %v276 = vpack.c.b16 %v261, %v260
    %v277 = vpack.c.b16 %v263, %v262
    %v278 = vpack.c.b16 %v265, %v264
    %v279 = vpack.c.b16 %v267, %v266
    %v280 = vpack.c.b16 %v269, %v268
    %v281 = vpack.c.b16 %v271, %v270
    %v282 = vpack.c.b16 %v273, %v272
    %v283 = vpack.c.b16 %v275, %v274
    %292 = vmatpush.bf16.msra.mxu0 %v283
    %293 = vmatpush.bf16.msra.mxu0 %v282
    %294 = vmatpush.bf16.msra.mxu0 %v281
    %295 = vmatpush.bf16.msra.mxu0 %v280
    %296 = vmatpush.bf16.msra.mxu0 %v279
    %297 = vmatpush.bf16.msra.mxu0 %v278
    %298 = vmatpush.bf16.msra.mxu0 %v277
    %299 = vmatpush.bf16.msra.mxu0 %v276
    %300 = vmatmul.bf16.gmra.mxu0 %v223
    %v301 = vpop.f32.mrf.mxu0
    %v302 = vadd.f32 %v242, %v301
    %v303 = vpop.f32.mrf.mxu0
    %304 = vdwg.mxu0
    %v305 = vmax.f32 %v302, 0.0
    %v306 = vpack.c.bf16 %v305, %v305
    %v307 = vld [vmem:[#allocation8] sm:$0xf]
    %v308 = vld [vmem:[#allocation8 + $0x4] sm:$0xf]
    %v309 = vld [vmem:[#allocation8 + $0x8] sm:$0xf]
    %v310 = vld [vmem:[#allocation8 + $0xc] sm:$0xf]
    %v311 = vld [vmem:[#allocation8 + $0x10] sm:$0xf]
    %v312 = vld [vmem:[#allocation8 + $0x14] sm:$0xf]
    %v313 = vld [vmem:[#allocation8 + $0x18] sm:$0xf]
    %v314 = vld [vmem:[#allocation8 + $0x1c] sm:$0xf]
    %v315 = vld [vmem:[#allocation8 + $0x20] sm:$0xf]
    %v316 = vld [vmem:[#allocation8 + $0x24] sm:$0xf]
    %v317 = vld [vmem:[#allocation8 + $0x28] sm:$0xf]
    %v318 = vld [vmem:[#allocation8 + $0x2c] sm:$0xf]
    %v319 = vld [vmem:[#allocation8 + $0x30] sm:$0xf]
    %v320 = vld [vmem:[#allocation8 + $0x34] sm:$0xf]
    %v321 = vld [vmem:[#allocation8 + $0x38] sm:$0xf]
    %v322 = vld [vmem:[#allocation8 + $0x3c] sm:$0xf]
    %v323 = vld [vmem:[%s5] sm:$0x1]
    %v325 = vperm.slane %v323, 0
    %v343 = vunpack.c.l.b16 %v307
    %v344 = vunpack.c.l.b16 %v308
    %v345 = vunpack.c.l.b16 %v309
    %v346 = vunpack.c.l.b16 %v310
    %v347 = vunpack.c.l.b16 %v311
    %v348 = vunpack.c.l.b16 %v312
    %v349 = vunpack.c.l.b16 %v313
    %v350 = vunpack.c.l.b16 %v314
    %v351 = vunpack.c.l.b16 %v315
    %v352 = vunpack.c.l.b16 %v316
    %v353 = vunpack.c.l.b16 %v317
    %v354 = vunpack.c.l.b16 %v318
    %v355 = vunpack.c.l.b16 %v319
    %v356 = vunpack.c.l.b16 %v320
    %v357 = vunpack.c.l.b16 %v321
    %v358 = vunpack.c.l.b16 %v322
    %v359 = vpack.c.b16 %v344, %v343
    %v360 = vpack.c.b16 %v346, %v345
    %v361 = vpack.c.b16 %v348, %v347
    %v362 = vpack.c.b16 %v350, %v349
    %v363 = vpack.c.b16 %v352, %v351
    %v364 = vpack.c.b16 %v354, %v353
    %v365 = vpack.c.b16 %v356, %v355
    %v366 = vpack.c.b16 %v358, %v357
    %375 = vmatpush.bf16.msra.mxu0 %v366
    %376 = vmatpush.bf16.msra.mxu0 %v365
    %377 = vmatpush.bf16.msra.mxu0 %v364
    %378 = vmatpush.bf16.msra.mxu0 %v363
    %379 = vmatpush.bf16.msra.mxu0 %v362
    %380 = vmatpush.bf16.msra.mxu0 %v361
    %381 = vmatpush.bf16.msra.mxu0 %v360
    %382 = vmatpush.bf16.msra.mxu0 %v359
    %383 = vmatmul.bf16.gmra.mxu0 %v306
    %v384 = vpop.f32.mrf.mxu0
    %v385 = vadd.f32 %v325, %v384
    %v386 = vpop.f32.mrf.mxu0
    %387 = vdwg.mxu0
    %388 = vst [vmem:[#allocation10] sm:$0xff] %v385
    // Predicated region
    $region42: #{tpu_custom_call.1} parent=1 // pred_check
      _
    $region43: #{tpu_custom_call.1} parent=1 // pred_check_branch
      %390 = sbr.rel (0) target = $region45
    $region44: #{tpu_custom_call.1} parent=1 // pred_region
      %392 = vsyncadd [#allocation4], 0
      %s394 = sshll.u32 [#allocation10], 4
      %s395 = int_to_ptr.vmem [resolvable:$true] %s394
      %s396 = sshll.u32 %s6, 4
      %s397 = int_to_ptr.hbm [resolvable:$true] %s396
      %399 = dma.vmem_to_hbm [thread:$0]  %s395, 128, %s397, [#allocation4]
    $region45: #{tpu_custom_call.1} parent=1 // pred_fallthru
      _
    // Predicated region
    $region46: #{tpu_custom_call.1} parent=1 // pred_check
      _
    $region47: #{tpu_custom_call.1} parent=1 // pred_check_branch
      %401 = sbr.rel (0) target = $region49
    $region48: #{tpu_custom_call.1} parent=1 // pred_region
      %403 = dma.done [#allocation4], 128
    $region49: #{tpu_custom_call.1} parent=1 // pred_fallthru
      _
    %404 = vsyncpa [#allocation3], 1
    %405 = vsyncpa [#allocation6], 1
    %406 = vsyncpa [#allocation9], 1
    %407 = vsyncpa [#allocation4], 1

</llo_original>
